<compile_context>
chip_gen: v5e
topology: v5e:2x2
jax: 0.10.0
libtpu: 0.0.40
codegen_flags: <defaults>
</compile_context>

<pallas_src>
import jax
import jax.numpy as jnp
from jax.experimental import pallas as pl
from jax.experimental.pallas import tpu as pltpu

H1 = 512           # layer-1 width
H2 = 256           # layer-2 width
OUT_PAD = 128      # lane-dense padded width of the final layer (real width = 1)
K_ALIGN = 128      # pad flattened feature dim to a multiple of this
TILE_K_MAX = 1024  # stream x / W1 through layer 1 in K chunks of at most this
DEFAULT_TILE_B = 1024


def _round_up(x, m):
    return ((x + m - 1) // m) * m


def _feature_padding(d):
    """Padded feature dim d_pad and K tile such that tile_k | d_pad, 128 | tile_k."""
    d_pad = _round_up(d, K_ALIGN)
    if d_pad <= TILE_K_MAX:
        return d_pad, d_pad
    return _round_up(d, TILE_K_MAX), TILE_K_MAX


def _pick_tile_b(n, max_tile=DEFAULT_TILE_B):
    """Batch tile: multiple of 16, capped, and >=2 grid steps once n > 16
    so dimension_semantics=('parallel',...) can shard across two TensorCores."""
    half = _round_up(max(-(-n // 2), 1), 16)
    return max(16, min(max_tile, half))


def _discriminator_kernel(x_ref, w1_ref, b1_ref, w2_ref, b2_ref, w3_ref, b3_ref,
                          o_ref, acc_ref):
    k = pl.program_id(1)

    @pl.when(k == 0)
    def _init():
        acc_ref[...] = jnp.zeros_like(acc_ref)

    # Layer 1, partial product over this K chunk (bf16 MXU, f32 accumulation).
    x = x_ref[...].astype(jnp.bfloat16)
    acc_ref[...] += jnp.dot(x, w1_ref[...], preferred_element_type=jnp.float32)

    @pl.when(k == pl.num_programs(1) - 1)
    def _finish():
        h1 = acc_ref[...] + b1_ref[...]
        h1 = jnp.maximum(h1, 0.2 * h1)                       # LeakyReLU(0.2)

        h2 = jnp.dot(h1.astype(jnp.bfloat16), w2_ref[...],
                     preferred_element_type=jnp.float32) + b2_ref[...]
        h2 = jnp.maximum(h2, 0.2 * h2)                       # LeakyReLU(0.2)

        h3 = jnp.dot(h2.astype(jnp.bfloat16), w3_ref[...],
                     preferred_element_type=jnp.float32) + b3_ref[...]
        o_ref[...] = jax.nn.sigmoid(h3).astype(o_ref.dtype)  # (TB, 128) bf16


def prepare_params(params):
    """One-time cast/pad of the weights (hoisted out of the per-call forward)."""
    w1, b1, w2, b2, w3, b3 = params
    d = w1.shape[0]
    d_pad, _ = _feature_padding(d)
    if d_pad != d:
        w1 = jnp.pad(w1, ((0, d_pad - d), (0, 0)))
    w3 = jnp.pad(w3, ((0, 0), (0, OUT_PAD - w3.shape[1])))
    b3 = jnp.pad(b3, ((0, 0), (0, OUT_PAD - b3.shape[1])))
    return (w1.astype(jnp.bfloat16), b1.astype(jnp.float32),
            w2.astype(jnp.bfloat16), b2.astype(jnp.float32),
            w3.astype(jnp.bfloat16), b3.astype(jnp.float32))


def discriminator_forward(img, prepared_params, tile_b=DEFAULT_TILE_B):
    """img: (N, C, H, W) float32. prepared_params: output of prepare_params.
    Returns validity (N, 1) float32."""
    w1, b1, w2, b2, w3, b3 = prepared_params
    n = img.shape[0]
    x = img.reshape(n, -1)                                    # torch .view(N, -1)
    d = x.shape[1]
    d_pad, tile_k = _feature_padding(d)
    assert w1.shape[0] == d_pad, "prepared params don't match the image size"

    tile_b = _pick_tile_b(n, tile_b)
    n_pad = _round_up(n, tile_b)

    if n_pad != n or d_pad != d:
        # Single fused pad+cast pass; bf16 halves the kernel's x read traffic.
        x = jnp.pad(x.astype(jnp.float32),
                    ((0, n_pad - n), (0, d_pad - d))).astype(jnp.bfloat16)
    else:
        # No padding needed: skip the extra HBM cast pass, cast inside the kernel.
        x = x.astype(jnp.float32)

    grid = (n_pad // tile_b, d_pad // tile_k)

    flops = 2 * n_pad * (d_pad * H1 + H1 * H2 + H2 * OUT_PAD)
    bytes_accessed = (
        n_pad * d_pad * x.dtype.itemsize                      # x
        + (d_pad * H1 + H1 * H2 + H2 * OUT_PAD) * 2           # weights (bf16)
        + (H1 + H2 + OUT_PAD) * 4                             # biases (f32)
        + n_pad * OUT_PAD * 2                                 # output (bf16)
    )
    cost = pl.CostEstimate(flops=flops,
                           transcendentals=n_pad * OUT_PAD,
                           bytes_accessed=bytes_accessed)

    out_padded = pl.pallas_call(
        _discriminator_kernel,
        out_shape=jax.ShapeDtypeStruct((n_pad, OUT_PAD), jnp.bfloat16),
        grid=grid,
        in_specs=[
            pl.BlockSpec((tile_b, tile_k), lambda i, k: (i, k)),   # x streams in B, K
            pl.BlockSpec((tile_k, H1),     lambda i, k: (k, 0)),   # W1 streams in K
            pl.BlockSpec((1, H1),          lambda i, k: (0, 0)),   # VMEM-resident
            pl.BlockSpec((H1, H2),         lambda i, k: (0, 0)),
            pl.BlockSpec((1, H2),          lambda i, k: (0, 0)),
            pl.BlockSpec((H2, OUT_PAD),    lambda i, k: (0, 0)),
            pl.BlockSpec((1, OUT_PAD),     lambda i, k: (0, 0)),
        ],
        out_specs=pl.BlockSpec((tile_b, OUT_PAD), lambda i, k: (i, 0)),
        scratch_shapes=[pltpu.VMEM((tile_b, H1), jnp.float32)],    # layer-1 accumulator
        compiler_params=pltpu.CompilerParams(
            dimension_semantics=("parallel", "arbitrary"),   # batch parallel, K reduce
            vmem_limit_bytes=48 * 1024 * 1024,               # fits v7x's 64 MiB core
        ),
        cost_estimate=cost,
    )(x, w1, b1, w2, b2, w3, b3)

    return out_padded[:n, :1].astype(jnp.float32)            # drop batch/lane padding


def init_params(key, in_features):
    """Deterministic init mimicking PyTorch Linear default U(-1/sqrt(fan_in), +)."""
    dims = [(in_features, H1), (H1, H2), (H2, 1)]
    params = []
    for fan_in, fan_out in dims:
        kw, kb, key = jax.random.split(key, 3)
        bound = 1.0 / jnp.sqrt(float(fan_in))
        w = jax.random.uniform(kw, (fan_in, fan_out), jnp.float32, -bound, bound)
        b = jax.random.uniform(kb, (1, fan_out), jnp.float32, -bound, bound)
        params += [w, b]
    return tuple(params)


def reference_forward(img, params):
    """Pure-JAX f32 reference for correctness checking."""
    w1, b1, w2, b2, w3, b3 = params
    x = img.reshape(img.shape[0], -1).astype(jnp.float32)
    h = x @ w1 + b1
    h = jnp.where(h > 0, h, 0.2 * h)
    h = h @ w2 + b2
    h = jnp.where(h > 0, h, 0.2 * h)
    h = h @ w3 + b3
    return jax.nn.sigmoid(h)


if __name__ == "__main__":
    # Small config consistent with the module: channels=1, img_size=16 -> D=256.
    batch, channels, img_size = 4, 1, 16
    in_features = channels * img_size * img_size

    key = jax.random.PRNGKey(0)
    k_img, k_par = jax.random.split(key)
    img = jax.random.normal(k_img, (batch, channels, img_size, img_size),
                            dtype=jnp.float32)
    params = init_params(k_par, in_features)
    prepared = prepare_params(params)       # hoisted: cast/pad weights once

    out = discriminator_forward(img, prepared)
    out = jax.block_until_ready(out)

    ref = reference_forward(img, params)
    assert out.shape == (batch, 1)
    # bf16 MXU operands + bf16 output store with f32 accumulation -> relaxed tol.
    assert jnp.allclose(out, ref, atol=2e-2, rtol=2e-2), (
        f"max abs diff {jnp.max(jnp.abs(out - ref))}")

    print("KERNEL_OK")
</pallas_src>

<mosaic_0001>
module attributes {stable_mosaic.version = 11 : i64} {
  func.func @_discriminator_kernel(%arg0: i32, %arg1: i32, %arg2: memref<16x256xbf16, #tpu.memory_space<vmem>>, %arg3: memref<256x512xbf16, #tpu.memory_space<vmem>>, %arg4: memref<1x512xf32, #tpu.memory_space<vmem>>, %arg5: memref<512x256xbf16, #tpu.memory_space<vmem>>, %arg6: memref<1x256xf32, #tpu.memory_space<vmem>>, %arg7: memref<256x128xbf16, #tpu.memory_space<vmem>>, %arg8: memref<1x128xf32, #tpu.memory_space<vmem>>, %arg9: memref<16x128xbf16, #tpu.memory_space<vmem>>, %arg10: memref<16x512xf32, #tpu.memory_space<vmem>>) attributes {dimension_semantics = [#tpu.dimension_semantics<parallel>, #tpu.dimension_semantics<arbitrary>], iteration_bounds = array<i64: 1, 1>, scalar_prefetch = 0 : i64, scratch_operands = 1 : i64, tpu.core_type = #tpu.core_type<tc>, window_params = [{transform_indices = @transform_0, window_bounds = array<i64: 16, 256>}, {transform_indices = @transform_1, window_bounds = array<i64: 256, 512>}, {pipeline_mode = #tpu.pipeline_mode<synchronous>, transform_indices = @transform_2, window_bounds = array<i64: 1, 512>}, {pipeline_mode = #tpu.pipeline_mode<synchronous>, transform_indices = @transform_3, window_bounds = array<i64: 512, 256>}, {pipeline_mode = #tpu.pipeline_mode<synchronous>, transform_indices = @transform_4, window_bounds = array<i64: 1, 256>}, {pipeline_mode = #tpu.pipeline_mode<synchronous>, transform_indices = @transform_5, window_bounds = array<i64: 256, 128>}, {pipeline_mode = #tpu.pipeline_mode<synchronous>, transform_indices = @transform_6, window_bounds = array<i64: 1, 128>}, {transform_indices = @transform_7, window_bounds = array<i64: 16, 128>}]} {
    %c0_i32 = arith.constant 0 : i32
    %0 = arith.cmpi eq, %arg1, %c0_i32 : i32
    %1 = arith.extui %0 : i1 to i32
    %c0_i32_0 = arith.constant 0 : i32
    %2 = arith.cmpi ne, %1, %c0_i32_0 : i32
    scf.if %2 {
      %cst_10 = arith.constant 0.000000e+00 : f32
      %12 = vector.broadcast %cst_10 : f32 to vector<16x512xf32>
      %c0_11 = arith.constant 0 : index
      %c0_12 = arith.constant 0 : index
      %13 = vector.load %arg10[%c0_11, %c0_12] : memref<16x512xf32, #tpu.memory_space<vmem>>, vector<16x512xf32>
      tpu.vector_store %arg10[%c0_11, %c0_12], %12 {strides = array<i32>} : memref<16x512xf32, #tpu.memory_space<vmem>>, vector<16x512xf32>,
    } else {
    }
    %c0 = arith.constant 0 : index
    %c0_1 = arith.constant 0 : index
    %3 = vector.load %arg2[%c0, %c0_1] : memref<16x256xbf16, #tpu.memory_space<vmem>>, vector<16x256xbf16>
    %c0_2 = arith.constant 0 : index
    %c0_3 = arith.constant 0 : index
    %4 = vector.load %arg10[%c0_2, %c0_3] : memref<16x512xf32, #tpu.memory_space<vmem>>, vector<16x512xf32>
    %c0_4 = arith.constant 0 : index
    %c0_5 = arith.constant 0 : index
    %5 = vector.load %arg3[%c0_4, %c0_5] : memref<256x512xbf16, #tpu.memory_space<vmem>>, vector<256x512xbf16>
    %cst = arith.constant dense<0.000000e+00> : vector<16x512xf32>
    %6 = tpu.matmul %3, %5, %cst {dimension_numbers = #tpu.dot_dimension_numbers<[1], [0], [0], [1], [0, 0, 1, 1], [], []>} : vector<16x256xbf16>, vector<256x512xbf16>, vector<16x512xf32> -> vector<16x512xf32>
    %7 = arith.addf %4, %6 : vector<16x512xf32>
    %c0_6 = arith.constant 0 : index
    %c0_7 = arith.constant 0 : index
    %8 = vector.load %arg10[%c0_6, %c0_7] : memref<16x512xf32, #tpu.memory_space<vmem>>, vector<16x512xf32>
    tpu.vector_store %arg10[%c0_6, %c0_7], %7 {strides = array<i32>} : memref<16x512xf32, #tpu.memory_space<vmem>>, vector<16x512xf32>,
    %c0_i32_8 = arith.constant 0 : i32
    %9 = arith.cmpi eq, %arg1, %c0_i32_8 : i32
    %10 = arith.extui %9 : i1 to i32
    %c0_i32_9 = arith.constant 0 : i32
    %11 = arith.cmpi ne, %10, %c0_i32_9 : i32
    scf.if %11 {
      %c0_10 = arith.constant 0 : index
      %c0_11 = arith.constant 0 : index
      %12 = vector.load %arg10[%c0_10, %c0_11] : memref<16x512xf32, #tpu.memory_space<vmem>>, vector<16x512xf32>
      %c0_12 = arith.constant 0 : index
      %c0_13 = arith.constant 0 : index
      %13 = vector.load %arg4[%c0_12, %c0_13] : memref<1x512xf32, #tpu.memory_space<vmem>>, vector<1x512xf32>
      %14 = vector.broadcast %13 : vector<1x512xf32> to vector<16x512xf32>
      %15 = arith.addf %12, %14 : vector<16x512xf32>
      %cst_14 = arith.constant 2.000000e-01 : f32
      %16 = vector.broadcast %cst_14 : f32 to vector<16x512xf32>
      %17 = arith.mulf %16, %15 : vector<16x512xf32>
      %18 = arith.maximumf %15, %17 : vector<16x512xf32>
      %19 = arith.truncf %18 : vector<16x512xf32> to vector<16x512xbf16>
      %c0_15 = arith.constant 0 : index
      %c0_16 = arith.constant 0 : index
      %20 = vector.load %arg5[%c0_15, %c0_16] : memref<512x256xbf16, #tpu.memory_space<vmem>>, vector<512x256xbf16>
      %cst_17 = arith.constant dense<0.000000e+00> : vector<16x256xf32>
      %21 = tpu.matmul %19, %20, %cst_17 {dimension_numbers = #tpu.dot_dimension_numbers<[1], [0], [0], [1], [0, 0, 1, 1], [], []>} : vector<16x512xbf16>, vector<512x256xbf16>, vector<16x256xf32> -> vector<16x256xf32>
      %c0_18 = arith.constant 0 : index
      %c0_19 = arith.constant 0 : index
      %22 = vector.load %arg6[%c0_18, %c0_19] : memref<1x256xf32, #tpu.memory_space<vmem>>, vector<1x256xf32>
      %23 = vector.broadcast %22 : vector<1x256xf32> to vector<16x256xf32>
      %24 = arith.addf %21, %23 : vector<16x256xf32>
      %cst_20 = arith.constant 2.000000e-01 : f32
      %25 = vector.broadcast %cst_20 : f32 to vector<16x256xf32>
      %26 = arith.mulf %25, %24 : vector<16x256xf32>
      %27 = arith.maximumf %24, %26 : vector<16x256xf32>
      %28 = arith.truncf %27 : vector<16x256xf32> to vector<16x256xbf16>
      %c0_21 = arith.constant 0 : index
      %c0_22 = arith.constant 0 : index
      %29 = vector.load %arg7[%c0_21, %c0_22] : memref<256x128xbf16, #tpu.memory_space<vmem>>, vector<256x128xbf16>
      %cst_23 = arith.constant dense<0.000000e+00> : vector<16x128xf32>
      %30 = tpu.matmul %28, %29, %cst_23 {dimension_numbers = #tpu.dot_dimension_numbers<[1], [0], [0], [1], [0, 0, 1, 1], [], []>} : vector<16x256xbf16>, vector<256x128xbf16>, vector<16x128xf32> -> vector<16x128xf32>
      %c0_24 = arith.constant 0 : index
      %c0_25 = arith.constant 0 : index
      %31 = vector.load %arg8[%c0_24, %c0_25] : memref<1x128xf32, #tpu.memory_space<vmem>>, vector<1x128xf32>
      %32 = vector.broadcast %31 : vector<1x128xf32> to vector<16x128xf32>
      %33 = arith.addf %30, %32 : vector<16x128xf32>
      %34 = arith.negf %33 : vector<16x128xf32>
      %35 = math.exp %34 : vector<16x128xf32>
      %cst_26 = arith.constant 1.000000e+00 : f32
      %36 = vector.broadcast %cst_26 : f32 to vector<16x128xf32>
      %37 = arith.addf %36, %35 : vector<16x128xf32>
      %38 = arith.divf %36, %37 : vector<16x128xf32>
      %39 = arith.truncf %38 : vector<16x128xf32> to vector<16x128xbf16>
      %c0_27 = arith.constant 0 : index
      %c0_28 = arith.constant 0 : index
      %40 = vector.load %arg9[%c0_27, %c0_28] : memref<16x128xbf16, #tpu.memory_space<vmem>>, vector<16x128xbf16>
      tpu.vector_store %arg9[%c0_27, %c0_28], %39 {strides = array<i32>} : memref<16x128xbf16, #tpu.memory_space<vmem>>, vector<16x128xbf16>,
    } else {
    }
    return
  }
  func.func @transform_0(%arg0: i32, %arg1: i32) -> (i32, i32) {
    %c0_i32 = arith.constant 0 : i32
    return %arg0, %arg1 : i32, i32
  }
  func.func @transform_1(%arg0: i32, %arg1: i32) -> (i32, i32) {
    %c0_i32 = arith.constant 0 : i32
    %c0_i32_0 = arith.constant 0 : i32
    return %arg1, %c0_i32 : i32, i32
  }
  func.func @transform_2(%arg0: i32, %arg1: i32) -> (i32, i32) {
    %c0_i32 = arith.constant 0 : i32
    %c0_i32_0 = arith.constant 0 : i32
    %c0_i32_1 = arith.constant 0 : i32
    return %c0_i32, %c0_i32_0 : i32, i32
  }
  func.func @transform_3(%arg0: i32, %arg1: i32) -> (i32, i32) {
    %c0_i32 = arith.constant 0 : i32
    %c0_i32_0 = arith.constant 0 : i32
    %c0_i32_1 = arith.constant 0 : i32
    return %c0_i32, %c0_i32_0 : i32, i32
  }
  func.func @transform_4(%arg0: i32, %arg1: i32) -> (i32, i32) {
    %c0_i32 = arith.constant 0 : i32
    %c0_i32_0 = arith.constant 0 : i32
    %c0_i32_1 = arith.constant 0 : i32
    return %c0_i32, %c0_i32_0 : i32, i32
  }
  func.func @transform_5(%arg0: i32, %arg1: i32) -> (i32, i32) {
    %c0_i32 = arith.constant 0 : i32
    %c0_i32_0 = arith.constant 0 : i32
    %c0_i32_1 = arith.constant 0 : i32
    return %c0_i32, %c0_i32_0 : i32, i32
  }
  func.func @transform_6(%arg0: i32, %arg1: i32) -> (i32, i32) {
    %c0_i32 = arith.constant 0 : i32
    %c0_i32_0 = arith.constant 0 : i32
    %c0_i32_1 = arith.constant 0 : i32
    return %c0_i32, %c0_i32_0 : i32, i32
  }
  func.func @transform_7(%arg0: i32, %arg1: i32) -> (i32, i32) {
    %c0_i32 = arith.constant 0 : i32
    %c0_i32_0 = arith.constant 0 : i32
    return %arg0, %c0_i32 : i32, i32
  }
}

</mosaic_0001>

<llo_original>
// kernel: tpu_custom_call.1
$region0: #{tpu_custom_call.1}
  #allocation0 [shape = 'u32[]', space=smem, size = 0x4, offset = 0x4, fixed_abs, tag = 'smem constant byte address 0x4 - core index']
  #allocation1 [shape = 'u32[72,128]{1,0:T(1,128)}', space=vmem, size = 0x9000, scoped, tag = 'internal scratch']
  #allocation2 [shape = 'f32[16,512]{1,0:T(8,128)}', space=vmem, size = 0x8000, scoped, tag = 'scratch operand']
  %s0 = inlined_call_operand.hbm [shape: bf16[16,256], index: 0, kind: input, shape index: {}]
  %s1 = inlined_call_operand.hbm [shape: bf16[256,512], index: 1, kind: input, shape index: {}]
  %s2 = inlined_call_operand.hbm [shape: f32[1,512], index: 2, kind: input, shape index: {}]
  %s3 = inlined_call_operand.hbm [shape: bf16[512,256], index: 3, kind: input, shape index: {}]
  %s4 = inlined_call_operand.vmem [shape: f32[1,256], index: 4, kind: input, shape index: {}]
  %s5 = inlined_call_operand.hbm [shape: bf16[256,128], index: 5, kind: input, shape index: {}]
  %s6 = inlined_call_operand.vmem [shape: f32[1,128], index: 6, kind: input, shape index: {}]
  %s7 = inlined_call_operand.hbm [shape: bf16[16,128], index: 7, kind: output, shape index: {}]
  %s8 = sld [smem:[#allocation0]]
  $region66: #{tpu_custom_call.1} parent=0
    _
  %s10 = ssub.s32 1, %s8
  %s11 = scalar_select 0, %s10, %s8
  $region1: #{tpu_custom_call.1} parent=0
    #allocation3 [shape = 'u8[8192]{0}', space=vmem, size = 0x2000, scoped, tag = 'input window, operand 0, single buffered']
    #allocation4 [shape = 's32[1]{0}', space=sflag, size = 0x4, scoped, tag = 'scoped memory for tpu_custom_call.1']
    #allocation5 [shape = 's32[1]{0}', space=sflag, size = 0x4, scoped, tag = 'scoped memory for tpu_custom_call.1']
    #allocation6 [shape = 'u8[262144]{0}', space=vmem, size = 0x40000, scoped, tag = 'input window, operand 1, single buffered']
    #allocation7 [shape = 's32[1]{0}', space=sflag, size = 0x4, scoped, tag = 'scoped memory for tpu_custom_call.1']
    #allocation8 [shape = 'u8[2048]{0}', space=vmem, size = 0x800, scoped, tag = 'input window, operand 2, single buffered']
    #allocation9 [shape = 'u8[262144]{0}', space=vmem, size = 0x40000, scoped, tag = 'input window, operand 3, single buffered']
    #allocation10 [shape = 's32[1]{0}', space=sflag, size = 0x4, scoped, tag = 'scoped memory for tpu_custom_call.1']
    #allocation11 [shape = 'u8[65536]{0}', space=vmem, size = 0x10000, scoped, tag = 'input window, operand 5, single buffered']
    #allocation12 [shape = 'u8[4096]{0}', space=vmem, size = 0x1000, scoped, tag = 'output window, operand 0, single buffered']
    %12 = vsyncpa [#allocation4], 0
    %13 = vsyncpa [#allocation7], 0
    %14 = vsyncpa [#allocation10], 0
    %15 = vsyncpa [#allocation5], 0
    // Predicated region
    $region2: #{tpu_custom_call.1} parent=1 // pred_check
      _
    $region3: #{tpu_custom_call.1} parent=1 // pred_check_branch
      %17 = sbr.rel (0) target = $region5
    $region4: #{tpu_custom_call.1} parent=1 // pred_region
      %19 = vsyncadd [#allocation4], 0
      %s20 = sshll.u32 %s0, 4
      %s21 = int_to_ptr.hbm [resolvable:$true] %s20
      %s22 = sshll.u32 [#allocation3], 4
      %s23 = int_to_ptr.vmem [resolvable:$true] %s22
      %28 = dma.hbm_to_vmem [thread:$0]  %s21, 256, %s23, [#allocation4], 128, 128, 8
    $region5: #{tpu_custom_call.1} parent=1 // pred_fallthru
      _
    // Predicated region
    $region6: #{tpu_custom_call.1} parent=1 // pred_check
      _
    $region7: #{tpu_custom_call.1} parent=1 // pred_check_branch
      %30 = sbr.rel (0) target = $region9
    $region8: #{tpu_custom_call.1} parent=1 // pred_region
      %32 = vsyncadd [#allocation7], 0
      %s33 = sshll.u32 %s1, 4
      %s34 = int_to_ptr.hbm [resolvable:$true] %s33
      %s35 = sshll.u32 [#allocation6], 4
      %s36 = int_to_ptr.vmem [resolvable:$true] %s35
      %41 = dma.hbm_to_vmem [thread:$0]  %s34, 8192, %s36, [#allocation7], 256, 256, 16
    $region9: #{tpu_custom_call.1} parent=1 // pred_fallthru
      _
    // Predicated region
    $region10: #{tpu_custom_call.1} parent=1 // pred_check
      _
    $region11: #{tpu_custom_call.1} parent=1 // pred_check_branch
      %43 = sbr.rel (0) target = $region13
    $region12: #{tpu_custom_call.1} parent=1 // pred_region
      %45 = vsyncadd [#allocation7], 0
      %s47 = sshll.u32 %s2, 4
      %s48 = int_to_ptr.hbm [resolvable:$true] %s47
      %s49 = sshll.u32 [#allocation8], 4
      %s50 = int_to_ptr.vmem [resolvable:$true] %s49
      %52 = dma.hbm_to_vmem [thread:$0]  %s48, 64, %s50, [#allocation7]
    $region13: #{tpu_custom_call.1} parent=1 // pred_fallthru
      _
    // Predicated region
    $region14: #{tpu_custom_call.1} parent=1 // pred_check
      _
    $region15: #{tpu_custom_call.1} parent=1 // pred_check_branch
      %54 = sbr.rel (0) target = $region17
    $region16: #{tpu_custom_call.1} parent=1 // pred_region
      %56 = vsyncadd [#allocation10], 0
      %s57 = sshll.u32 %s3, 4
      %s58 = int_to_ptr.hbm [resolvable:$true] %s57
      %s59 = sshll.u32 [#allocation9], 4
      %s60 = int_to_ptr.vmem [resolvable:$true] %s59
      %65 = dma.hbm_to_vmem [thread:$0]  %s58, 8192, %s60, [#allocation10], 128, 128, 8
    $region17: #{tpu_custom_call.1} parent=1 // pred_fallthru
      _
    // Predicated region
    $region18: #{tpu_custom_call.1} parent=1 // pred_check
      _
    $region19: #{tpu_custom_call.1} parent=1 // pred_check_branch
      %67 = sbr.rel (0) target = $region21
    $region20: #{tpu_custom_call.1} parent=1 // pred_region
      _
    $region21: #{tpu_custom_call.1} parent=1 // pred_fallthru
      _
    // Predicated region
    $region22: #{tpu_custom_call.1} parent=1 // pred_check
      _
    $region23: #{tpu_custom_call.1} parent=1 // pred_check_branch
      %69 = sbr.rel (0) target = $region25
    $region24: #{tpu_custom_call.1} parent=1 // pred_region
      %71 = vsyncadd [#allocation10], 0
      %s72 = sshll.u32 %s5, 4
      %s73 = int_to_ptr.hbm [resolvable:$true] %s72
      %s74 = sshll.u32 [#allocation11], 4
      %s75 = int_to_ptr.vmem [resolvable:$true] %s74
      %80 = dma.hbm_to_vmem [thread:$0]  %s73, 2048, %s75, [#allocation10], 64, 64, 4
    $region25: #{tpu_custom_call.1} parent=1 // pred_fallthru
      _
    // Predicated region
    $region26: #{tpu_custom_call.1} parent=1 // pred_check
      _
    $region27: #{tpu_custom_call.1} parent=1 // pred_check_branch
      %82 = sbr.rel (0) target = $region29
    $region28: #{tpu_custom_call.1} parent=1 // pred_region
      _
    $region29: #{tpu_custom_call.1} parent=1 // pred_fallthru
      _
    // Predicated region
    $region30: #{tpu_custom_call.1} parent=1 // pred_check
      _
    $region31: #{tpu_custom_call.1} parent=1 // pred_check_branch
      %84 = sbr.rel (0) target = $region33
    $region32: #{tpu_custom_call.1} parent=1 // pred_region
      %86 = dma.done [#allocation4], 256
    $region33: #{tpu_custom_call.1} parent=1 // pred_fallthru
      _
    // Predicated region
    $region34: #{tpu_custom_call.1} parent=1 // pred_check
      _
    $region35: #{tpu_custom_call.1} parent=1 // pred_check_branch
      %88 = sbr.rel (0) target = $region37
    $region36: #{tpu_custom_call.1} parent=1 // pred_region
      %90 = dma.done [#allocation7], 8192
    $region37: #{tpu_custom_call.1} parent=1 // pred_fallthru
      _
    // Predicated region
    $region38: #{tpu_custom_call.1} parent=1 // pred_check
      _
    $region39: #{tpu_custom_call.1} parent=1 // pred_check_branch
      %92 = sbr.rel (0) target = $region41
    $region40: #{tpu_custom_call.1} parent=1 // pred_region
      %94 = dma.done [#allocation7], 64
    $region41: #{tpu_custom_call.1} parent=1 // pred_fallthru
      _
    // Predicated region
    $region42: #{tpu_custom_call.1} parent=1 // pred_check
      _
    $region43: #{tpu_custom_call.1} parent=1 // pred_check_branch
      %96 = sbr.rel (0) target = $region45
    $region44: #{tpu_custom_call.1} parent=1 // pred_region
      %98 = dma.done [#allocation10], 8192
    $region45: #{tpu_custom_call.1} parent=1 // pred_fallthru
      _
    // Predicated region
    $region46: #{tpu_custom_call.1} parent=1 // pred_check
      _
    $region47: #{tpu_custom_call.1} parent=1 // pred_check_branch
      %100 = sbr.rel (0) target = $region49
    $region48: #{tpu_custom_call.1} parent=1 // pred_region
      %102 = dma.done [#allocation10], 2048
    $region49: #{tpu_custom_call.1} parent=1 // pred_fallthru
      _
    %p103 = scmp.eq.s32.totalorder 0, 0
    // Predicated region
    $region50: #{tpu_custom_call.1} parent=1 // pred_check
      %p104 = pneg %p103
    $region51: #{tpu_custom_call.1} parent=1 // pred_check_branch
      %106 = sbr.rel (%p104) target = $region53
    $region52: #{tpu_custom_call.1} parent=1 // pred_region
      %107 = vst [vmem:[#allocation2] sm:$0xff] 0.0
      %108 = vst [vmem:[#allocation2 + $0x8] sm:$0xff] 0.0
      %109 = vst [vmem:[#allocation2 + $0x10] sm:$0xff] 0.0
      %110 = vst [vmem:[#allocation2 + $0x18] sm:$0xff] 0.0
      %111 = vst [vmem:[#allocation2 + $0x20] sm:$0xff] 0.0
      %112 = vst [vmem:[#allocation2 + $0x28] sm:$0xff] 0.0
      %113 = vst [vmem:[#allocation2 + $0x30] sm:$0xff] 0.0
      %114 = vst [vmem:[#allocation2 + $0x38] sm:$0xff] 0.0
    $region53: #{tpu_custom_call.1} parent=1 // pred_fallthru
      _
    %v115 = vld [vmem:[#allocation3] sm:$0xff]
    %v116 = vld [vmem:[#allocation3 + $0x8] sm:$0xff]
    %v117 = vld [vmem:[#allocation2] sm:$0xff]
    %v118 = vld [vmem:[#allocation2 + $0x8] sm:$0xff]
    %v119 = vld [vmem:[#allocation2 + $0x10] sm:$0xff]
    %v120 = vld [vmem:[#allocation2 + $0x18] sm:$0xff]
    %v121 = vld [vmem:[#allocation2 + $0x20] sm:$0xff]
    %v122 = vld [vmem:[#allocation2 + $0x28] sm:$0xff]
    %v123 = vld [vmem:[#allocation2 + $0x30] sm:$0xff]
    %v124 = vld [vmem:[#allocation2 + $0x38] sm:$0xff]
    %v125 = vld [vmem:[#allocation6] sm:$0xff]
    %v126 = vld [vmem:[#allocation6 + $0x8] sm:$0xff]
    %v127 = vld [vmem:[#allocation6 + $0x10] sm:$0xff]
    %v128 = vld [vmem:[#allocation6 + $0x18] sm:$0xff]
    %v129 = vld [vmem:[#allocation6 + $0x20] sm:$0xff]
    %v130 = vld [vmem:[#allocation6 + $0x28] sm:$0xff]
    %v131 = vld [vmem:[#allocation6 + $0x30] sm:$0xff]
    %v132 = vld [vmem:[#allocation6 + $0x38] sm:$0xff]
    %v133 = vld [vmem:[#allocation6 + $0x40] sm:$0xff]
    %v134 = vld [vmem:[#allocation6 + $0x48] sm:$0xff]
    %v135 = vld [vmem:[#allocation6 + $0x50] sm:$0xff]
    %v136 = vld [vmem:[#allocation6 + $0x58] sm:$0xff]
    %v137 = vld [vmem:[#allocation6 + $0x60] sm:$0xff]
    %v138 = vld [vmem:[#allocation6 + $0x68] sm:$0xff]
    %v139 = vld [vmem:[#allocation6 + $0x70] sm:$0xff]
    %v140 = vld [vmem:[#allocation6 + $0x78] sm:$0xff]
    %v141 = vld [vmem:[#allocation6 + $0x80] sm:$0xff]
    %v142 = vld [vmem:[#allocation6 + $0x88] sm:$0xff]
    %v143 = vld [vmem:[#allocation6 + $0x90] sm:$0xff]
    %v144 = vld [vmem:[#allocation6 + $0x98] sm:$0xff]
    %v145 = vld [vmem:[#allocation6 + $0xa0] sm:$0xff]
    %v146 = vld [vmem:[#allocation6 + $0xa8] sm:$0xff]
    %v147 = vld [vmem:[#allocation6 + $0xb0] sm:$0xff]
    %v148 = vld [vmem:[#allocation6 + $0xb8] sm:$0xff]
    %v149 = vld [vmem:[#allocation6 + $0xc0] sm:$0xff]
    %v150 = vld [vmem:[#allocation6 + $0xc8] sm:$0xff]
    %v151 = vld [vmem:[#allocation6 + $0xd0] sm:$0xff]
    %v152 = vld [vmem:[#allocation6 + $0xd8] sm:$0xff]
    %v153 = vld [vmem:[#allocation6 + $0xe0] sm:$0xff]
    %v154 = vld [vmem:[#allocation6 + $0xe8] sm:$0xff]
    %v155 = vld [vmem:[#allocation6 + $0xf0] sm:$0xff]
    %v156 = vld [vmem:[#allocation6 + $0xf8] sm:$0xff]
    %v157 = vld [vmem:[#allocation6 + $0x100] sm:$0xff]
    %v158 = vld [vmem:[#allocation6 + $0x108] sm:$0xff]
    %v159 = vld [vmem:[#allocation6 + $0x110] sm:$0xff]
    %v160 = vld [vmem:[#allocation6 + $0x118] sm:$0xff]
    %v161 = vld [vmem:[#allocation6 + $0x120] sm:$0xff]
    %v162 = vld [vmem:[#allocation6 + $0x128] sm:$0xff]
    %v163 = vld [vmem:[#allocation6 + $0x130] sm:$0xff]
    %v164 = vld [vmem:[#allocation6 + $0x138] sm:$0xff]
    %v165 = vld [vmem:[#allocation6 + $0x140] sm:$0xff]
    %v166 = vld [vmem:[#allocation6 + $0x148] sm:$0xff]
    %v167 = vld [vmem:[#allocation6 + $0x150] sm:$0xff]
    %v168 = vld [vmem:[#allocation6 + $0x158] sm:$0xff]
    %v169 = vld [vmem:[#allocation6 + $0x160] sm:$0xff]
    %v170 = vld [vmem:[#allocation6 + $0x168] sm:$0xff]
    %v171 = vld [vmem:[#allocation6 + $0x170] sm:$0xff]
    %v172 = vld [vmem:[#allocation6 + $0x178] sm:$0xff]
    %v173 = vld [vmem:[#allocation6 + $0x180] sm:$0xff]
    %v174 = vld [vmem:[#allocation6 + $0x188] sm:$0xff]
    %v175 = vld [vmem:[#allocation6 + $0x190] sm:$0xff]
    %v176 = vld [vmem:[#allocation6 + $0x198] sm:$0xff]
    %v177 = vld [vmem:[#allocation6 + $0x1a0] sm:$0xff]
    %v178 = vld [vmem:[#allocation6 + $0x1a8] sm:$0xff]
    %v179 = vld [vmem:[#allocation6 + $0x1b0] sm:$0xff]
    %v180 = vld [vmem:[#allocation6 + $0x1b8] sm:$0xff]
    %v181 = vld [vmem:[#allocation6 + $0x1c0] sm:$0xff]
    %v182 = vld [vmem:[#allocation6 + $0x1c8] sm:$0xff]
    %v183 = vld [vmem:[#allocation6 + $0x1d0] sm:$0xff]
    %v184 = vld [vmem:[#allocation6 + $0x1d8] sm:$0xff]
    %v185 = vld [vmem:[#allocation6 + $0x1e0] sm:$0xff]
    %v186 = vld [vmem:[#allocation6 + $0x1e8] sm:$0xff]
    %v187 = vld [vmem:[#allocation6 + $0x1f0] sm:$0xff]
    %v188 = vld [vmem:[#allocation6 + $0x1f8] sm:$0xff]
    %v191 = vunpack.c.l.b16 %v115
    %v192 = vunpack.c.h.b16 %v115
    %v193 = vunpack.c.l.b16 %v116
    %v194 = vunpack.c.h.b16 %v116
    %v195 = vpack.c.b16 %v193, %v191
    %v196 = vpack.c.b16 %v194, %v192
    %v263 = vunpack.c.l.b16 %v125
    %v264 = vunpack.c.h.b16 %v125
    %v265 = vunpack.c.l.b16 %v126
    %v266 = vunpack.c.h.b16 %v126
    %v267 = vunpack.c.l.b16 %v127
    %v268 = vunpack.c.h.b16 %v127
    %v269 = vunpack.c.l.b16 %v128
    %v270 = vunpack.c.h.b16 %v128
    %v271 = vunpack.c.l.b16 %v129
    %v272 = vunpack.c.h.b16 %v129
    %v273 = vunpack.c.l.b16 %v130
    %v274 = vunpack.c.h.b16 %v130
    %v275 = vunpack.c.l.b16 %v131
    %v276 = vunpack.c.h.b16 %v131
    %v277 = vunpack.c.l.b16 %v132
    %v278 = vunpack.c.h.b16 %v132
    %v279 = vunpack.c.l.b16 %v133
    %v280 = vunpack.c.h.b16 %v133
    %v281 = vunpack.c.l.b16 %v134
    %v282 = vunpack.c.h.b16 %v134
    %v283 = vunpack.c.l.b16 %v135
    %v284 = vunpack.c.h.b16 %v135
    %v285 = vunpack.c.l.b16 %v136
    %v286 = vunpack.c.h.b16 %v136
    %v287 = vunpack.c.l.b16 %v137
    %v288 = vunpack.c.h.b16 %v137
    %v289 = vunpack.c.l.b16 %v138
    %v290 = vunpack.c.h.b16 %v138
    %v291 = vunpack.c.l.b16 %v139
    %v292 = vunpack.c.h.b16 %v139
    %v293 = vunpack.c.l.b16 %v140
    %v294 = vunpack.c.h.b16 %v140
    %v295 = vunpack.c.l.b16 %v141
    %v296 = vunpack.c.h.b16 %v141
    %v297 = vunpack.c.l.b16 %v142
    %v298 = vunpack.c.h.b16 %v142
    %v299 = vunpack.c.l.b16 %v143
    %v300 = vunpack.c.h.b16 %v143
    %v301 = vunpack.c.l.b16 %v144
    %v302 = vunpack.c.h.b16 %v144
    %v303 = vunpack.c.l.b16 %v145
    %v304 = vunpack.c.h.b16 %v145
    %v305 = vunpack.c.l.b16 %v146
    %v306 = vunpack.c.h.b16 %v146
    %v307 = vunpack.c.l.b16 %v147
    %v308 = vunpack.c.h.b16 %v147
    %v309 = vunpack.c.l.b16 %v148
    %v310 = vunpack.c.h.b16 %v148
    %v311 = vunpack.c.l.b16 %v149
    %v312 = vunpack.c.h.b16 %v149
    %v313 = vunpack.c.l.b16 %v150
    %v314 = vunpack.c.h.b16 %v150
    %v315 = vunpack.c.l.b16 %v151
    %v316 = vunpack.c.h.b16 %v151
    %v317 = vunpack.c.l.b16 %v152
    %v318 = vunpack.c.h.b16 %v152
    %v319 = vunpack.c.l.b16 %v153
    %v320 = vunpack.c.h.b16 %v153
    %v321 = vunpack.c.l.b16 %v154
    %v322 = vunpack.c.h.b16 %v154
    %v323 = vunpack.c.l.b16 %v155
    %v324 = vunpack.c.h.b16 %v155
    %v325 = vunpack.c.l.b16 %v156
    %v326 = vunpack.c.h.b16 %v156
    %v327 = vunpack.c.l.b16 %v157
    %v328 = vunpack.c.h.b16 %v157
    %v329 = vunpack.c.l.b16 %v158
    %v330 = vunpack.c.h.b16 %v158
    %v331 = vunpack.c.l.b16 %v159
    %v332 = vunpack.c.h.b16 %v159
    %v333 = vunpack.c.l.b16 %v160
    %v334 = vunpack.c.h.b16 %v160
    %v335 = vunpack.c.l.b16 %v161
    %v336 = vunpack.c.h.b16 %v161
    %v337 = vunpack.c.l.b16 %v162
    %v338 = vunpack.c.h.b16 %v162
    %v339 = vunpack.c.l.b16 %v163
    %v340 = vunpack.c.h.b16 %v163
    %v341 = vunpack.c.l.b16 %v164
    %v342 = vunpack.c.h.b16 %v164
    %v343 = vunpack.c.l.b16 %v165
    %v344 = vunpack.c.h.b16 %v165
    %v345 = vunpack.c.l.b16 %v166
    %v346 = vunpack.c.h.b16 %v166
    %v347 = vunpack.c.l.b16 %v167
    %v348 = vunpack.c.h.b16 %v167
    %v349 = vunpack.c.l.b16 %v168
    %v350 = vunpack.c.h.b16 %v168
    %v351 = vunpack.c.l.b16 %v169
    %v352 = vunpack.c.h.b16 %v169
    %v353 = vunpack.c.l.b16 %v170
    %v354 = vunpack.c.h.b16 %v170
    %v355 = vunpack.c.l.b16 %v171
    %v356 = vunpack.c.h.b16 %v171
    %v357 = vunpack.c.l.b16 %v172
    %v358 = vunpack.c.h.b16 %v172
    %v359 = vunpack.c.l.b16 %v173
    %v360 = vunpack.c.h.b16 %v173
    %v361 = vunpack.c.l.b16 %v174
    %v362 = vunpack.c.h.b16 %v174
    %v363 = vunpack.c.l.b16 %v175
    %v364 = vunpack.c.h.b16 %v175
    %v365 = vunpack.c.l.b16 %v176
    %v366 = vunpack.c.h.b16 %v176
    %v367 = vunpack.c.l.b16 %v177
    %v368 = vunpack.c.h.b16 %v177
    %v369 = vunpack.c.l.b16 %v178
    %v370 = vunpack.c.h.b16 %v178
    %v371 = vunpack.c.l.b16 %v179
    %v372 = vunpack.c.h.b16 %v179
    %v373 = vunpack.c.l.b16 %v180
    %v374 = vunpack.c.h.b16 %v180
    %v375 = vunpack.c.l.b16 %v181
    %v376 = vunpack.c.h.b16 %v181
    %v377 = vunpack.c.l.b16 %v182
    %v378 = vunpack.c.h.b16 %v182
    %v379 = vunpack.c.l.b16 %v183
    %v380 = vunpack.c.h.b16 %v183
    %v381 = vunpack.c.l.b16 %v184
    %v382 = vunpack.c.h.b16 %v184
    %v383 = vunpack.c.l.b16 %v185
    %v384 = vunpack.c.h.b16 %v185
    %v385 = vunpack.c.l.b16 %v186
    %v386 = vunpack.c.h.b16 %v186
    %v387 = vunpack.c.l.b16 %v187
    %v388 = vunpack.c.h.b16 %v187
    %v389 = vunpack.c.l.b16 %v188
    %v390 = vunpack.c.h.b16 %v188
    %v391 = vpack.c.b16 %v267, %v263
    %v392 = vpack.c.b16 %v268, %v264
    %v393 = vpack.c.b16 %v269, %v265
    %v394 = vpack.c.b16 %v270, %v266
    %v395 = vpack.c.b16 %v275, %v271
    %v396 = vpack.c.b16 %v276, %v272
    %v397 = vpack.c.b16 %v277, %v273
    %v398 = vpack.c.b16 %v278, %v274
    %v399 = vpack.c.b16 %v283, %v279
    %v400 = vpack.c.b16 %v284, %v280
    %v401 = vpack.c.b16 %v285, %v281
    %v402 = vpack.c.b16 %v286, %v282
    %v403 = vpack.c.b16 %v291, %v287
    %v404 = vpack.c.b16 %v292, %v288
    %v405 = vpack.c.b16 %v293, %v289
    %v406 = vpack.c.b16 %v294, %v290
    %v407 = vpack.c.b16 %v299, %v295
    %v408 = vpack.c.b16 %v300, %v296
    %v409 = vpack.c.b16 %v301, %v297
    %v410 = vpack.c.b16 %v302, %v298
    %v411 = vpack.c.b16 %v307, %v303
    %v412 = vpack.c.b16 %v308, %v304
    %v413 = vpack.c.b16 %v309, %v305
    %v414 = vpack.c.b16 %v310, %v306
    %v415 = vpack.c.b16 %v315, %v311
    %v416 = vpack.c.b16 %v316, %v312
    %v417 = vpack.c.b16 %v317, %v313
    %v418 = vpack.c.b16 %v318, %v314
    %v419 = vpack.c.b16 %v323, %v319
    %v420 = vpack.c.b16 %v324, %v320
    %v421 = vpack.c.b16 %v325, %v321
    %v422 = vpack.c.b16 %v326, %v322
    %v423 = vpack.c.b16 %v331, %v327
    %v424 = vpack.c.b16 %v332, %v328
    %v425 = vpack.c.b16 %v333, %v329
    %v426 = vpack.c.b16 %v334, %v330
    %v427 = vpack.c.b16 %v339, %v335
    %v428 = vpack.c.b16 %v340, %v336
    %v429 = vpack.c.b16 %v341, %v337
    %v430 = vpack.c.b16 %v342, %v338
    %v431 = vpack.c.b16 %v347, %v343
    %v432 = vpack.c.b16 %v348, %v344
    %v433 = vpack.c.b16 %v349, %v345
    %v434 = vpack.c.b16 %v350, %v346
    %v435 = vpack.c.b16 %v355, %v351
    %v436 = vpack.c.b16 %v356, %v352
    %v437 = vpack.c.b16 %v357, %v353
    %v438 = vpack.c.b16 %v358, %v354
    %v439 = vpack.c.b16 %v363, %v359
    %v440 = vpack.c.b16 %v364, %v360
    %v441 = vpack.c.b16 %v365, %v361
    %v442 = vpack.c.b16 %v366, %v362
    %v443 = vpack.c.b16 %v371, %v367
    %v444 = vpack.c.b16 %v372, %v368
    %v445 = vpack.c.b16 %v373, %v369
    %v446 = vpack.c.b16 %v374, %v370
    %v447 = vpack.c.b16 %v379, %v375
    %v448 = vpack.c.b16 %v380, %v376
    %v449 = vpack.c.b16 %v381, %v377
    %v450 = vpack.c.b16 %v382, %v378
    %v451 = vpack.c.b16 %v387, %v383
    %v452 = vpack.c.b16 %v388, %v384
    %v453 = vpack.c.b16 %v389, %v385
    %v454 = vpack.c.b16 %v390, %v386
    %519 = vmatpush.bf16.msra.mxu0 %v419
    %520 = vmatpush.bf16.msra.mxu0 %v415
    %521 = vmatpush.bf16.msra.mxu0 %v411
    %522 = vmatpush.bf16.msra.mxu0 %v407
    %523 = vmatpush.bf16.msra.mxu0 %v403
    %524 = vmatpush.bf16.msra.mxu0 %v399
    %525 = vmatpush.bf16.msra.mxu0 %v395
    %526 = vmatpush.bf16.msra.mxu0 %v391
    %527 = vmatmul.bf16.gmra.mxu0 %v195
    %v528 = vpop.f32.mrf.mxu0
    %v529 = vadd.f32 0.0, %v528
    %v530 = vpop.f32.mrf.mxu0
    %v531 = vadd.f32 0.0, %v530
    %532 = vdwg.mxu0
    %533 = vmatpush.bf16.msra.mxu0 %v451
    %534 = vmatpush.bf16.msra.mxu0 %v447
    %535 = vmatpush.bf16.msra.mxu0 %v443
    %536 = vmatpush.bf16.msra.mxu0 %v439
    %537 = vmatpush.bf16.msra.mxu0 %v435
    %538 = vmatpush.bf16.msra.mxu0 %v431
    %539 = vmatpush.bf16.msra.mxu0 %v427
    %540 = vmatpush.bf16.msra.mxu0 %v423
    %541 = vmatmul.bf16.gmra.mxu0 %v196
    %v542 = vpop.f32.mrf.mxu0
    %v543 = vadd.f32 %v529, %v542
    %v544 = vpop.f32.mrf.mxu0
    %v545 = vadd.f32 %v531, %v544
    %546 = vdwg.mxu0
    %547 = vmatpush.bf16.msra.mxu0 %v420
    %548 = vmatpush.bf16.msra.mxu0 %v416
    %549 = vmatpush.bf16.msra.mxu0 %v412
    %550 = vmatpush.bf16.msra.mxu0 %v408
    %551 = vmatpush.bf16.msra.mxu0 %v404
    %552 = vmatpush.bf16.msra.mxu0 %v400
    %553 = vmatpush.bf16.msra.mxu0 %v396
    %554 = vmatpush.bf16.msra.mxu0 %v392
    %555 = vmatmul.bf16.gmra.mxu0 %v195
    %v556 = vpop.f32.mrf.mxu0
    %v557 = vadd.f32 0.0, %v556
    %v558 = vpop.f32.mrf.mxu0
    %v559 = vadd.f32 0.0, %v558
    %560 = vdwg.mxu0
    %561 = vmatpush.bf16.msra.mxu0 %v452
    %562 = vmatpush.bf16.msra.mxu0 %v448
    %563 = vmatpush.bf16.msra.mxu0 %v444
    %564 = vmatpush.bf16.msra.mxu0 %v440
    %565 = vmatpush.bf16.msra.mxu0 %v436
    %566 = vmatpush.bf16.msra.mxu0 %v432
    %567 = vmatpush.bf16.msra.mxu0 %v428
    %568 = vmatpush.bf16.msra.mxu0 %v424
    %569 = vmatmul.bf16.gmra.mxu0 %v196
    %v570 = vpop.f32.mrf.mxu0
    %v571 = vadd.f32 %v557, %v570
    %v572 = vpop.f32.mrf.mxu0
    %v573 = vadd.f32 %v559, %v572
    %574 = vdwg.mxu0
    %575 = vmatpush.bf16.msra.mxu0 %v421
    %576 = vmatpush.bf16.msra.mxu0 %v417
    %577 = vmatpush.bf16.msra.mxu0 %v413
    %578 = vmatpush.bf16.msra.mxu0 %v409
    %579 = vmatpush.bf16.msra.mxu0 %v405
    %580 = vmatpush.bf16.msra.mxu0 %v401
    %581 = vmatpush.bf16.msra.mxu0 %v397
    %582 = vmatpush.bf16.msra.mxu0 %v393
    %583 = vmatmul.bf16.gmra.mxu0 %v195
    %v584 = vpop.f32.mrf.mxu0
    %v585 = vadd.f32 0.0, %v584
    %v586 = vpop.f32.mrf.mxu0
    %v587 = vadd.f32 0.0, %v586
    %588 = vdwg.mxu0
    %589 = vmatpush.bf16.msra.mxu0 %v453
    %590 = vmatpush.bf16.msra.mxu0 %v449
    %591 = vmatpush.bf16.msra.mxu0 %v445
    %592 = vmatpush.bf16.msra.mxu0 %v441
    %593 = vmatpush.bf16.msra.mxu0 %v437
    %594 = vmatpush.bf16.msra.mxu0 %v433
    %595 = vmatpush.bf16.msra.mxu0 %v429
    %596 = vmatpush.bf16.msra.mxu0 %v425
    %597 = vmatmul.bf16.gmra.mxu0 %v196
    %v598 = vpop.f32.mrf.mxu0
    %v599 = vadd.f32 %v585, %v598
    %v600 = vpop.f32.mrf.mxu0
    %v601 = vadd.f32 %v587, %v600
    %602 = vdwg.mxu0
    %603 = vmatpush.bf16.msra.mxu0 %v422
    %604 = vmatpush.bf16.msra.mxu0 %v418
    %605 = vmatpush.bf16.msra.mxu0 %v414
    %606 = vmatpush.bf16.msra.mxu0 %v410
    %607 = vmatpush.bf16.msra.mxu0 %v406
    %608 = vmatpush.bf16.msra.mxu0 %v402
    %609 = vmatpush.bf16.msra.mxu0 %v398
    %610 = vmatpush.bf16.msra.mxu0 %v394
    %611 = vmatmul.bf16.gmra.mxu0 %v195
    %v612 = vpop.f32.mrf.mxu0
    %v613 = vadd.f32 0.0, %v612
    %v614 = vpop.f32.mrf.mxu0
    %v615 = vadd.f32 0.0, %v614
    %616 = vdwg.mxu0
    %617 = vmatpush.bf16.msra.mxu0 %v454
    %618 = vmatpush.bf16.msra.mxu0 %v450
    %619 = vmatpush.bf16.msra.mxu0 %v446
    %620 = vmatpush.bf16.msra.mxu0 %v442
    %621 = vmatpush.bf16.msra.mxu0 %v438
    %622 = vmatpush.bf16.msra.mxu0 %v434
    %623 = vmatpush.bf16.msra.mxu0 %v430
    %624 = vmatpush.bf16.msra.mxu0 %v426
    %625 = vmatmul.bf16.gmra.mxu0 %v196
    %v626 = vpop.f32.mrf.mxu0
    %v627 = vadd.f32 %v613, %v626
    %v628 = vpop.f32.mrf.mxu0
    %v629 = vadd.f32 %v615, %v628
    %630 = vdwg.mxu0
    %v631 = vadd.f32 %v117, %v543
    %v632 = vadd.f32 %v118, %v571
    %v633 = vadd.f32 %v119, %v599
    %v634 = vadd.f32 %v120, %v627
    %v635 = vadd.f32 %v121, %v545
    %v636 = vadd.f32 %v122, %v573
    %v637 = vadd.f32 %v123, %v601
    %v638 = vadd.f32 %v124, %v629
    %639 = vst [vmem:[#allocation2] sm:$0xff] %v631
    %640 = vst [vmem:[#allocation2 + $0x8] sm:$0xff] %v632
    %641 = vst [vmem:[#allocation2 + $0x10] sm:$0xff] %v633
    %642 = vst [vmem:[#allocation2 + $0x18] sm:$0xff] %v634
    %643 = vst [vmem:[#allocation2 + $0x20] sm:$0xff] %v635
    %644 = vst [vmem:[#allocation2 + $0x28] sm:$0xff] %v636
    %645 = vst [vmem:[#allocation2 + $0x30] sm:$0xff] %v637
    %646 = vst [vmem:[#allocation2 + $0x38] sm:$0xff] %v638
    // Predicated region
    $region54: #{tpu_custom_call.1} parent=1 // pred_check
      %p647 = pneg %p103
    $region55: #{tpu_custom_call.1} parent=1 // pred_check_branch
      %649 = sbr.rel (%p647) target = $region57
    $region56: #{tpu_custom_call.1} parent=1 // pred_region
      %v650 = vld [vmem:[#allocation2] sm:$0xff]
      %v651 = vld [vmem:[#allocation2 + $0x8] sm:$0xff]
      %v652 = vld [vmem:[#allocation2 + $0x10] sm:$0xff]
      %v653 = vld [vmem:[#allocation2 + $0x18] sm:$0xff]
      %v654 = vld [vmem:[#allocation2 + $0x20] sm:$0xff]
      %v655 = vld [vmem:[#allocation2 + $0x28] sm:$0xff]
      %v656 = vld [vmem:[#allocation2 + $0x30] sm:$0xff]
      %v657 = vld [vmem:[#allocation2 + $0x38] sm:$0xff]
      %v658 = vld [vmem:[#allocation8] sm:$0xf]
      %v660 = vperm.slane %v658, 0
      %v661 = vperm.slane %v658, 1
      %v662 = vperm.slane %v658, 2
      %v663 = vperm.slane %v658, 3
      %v668 = vadd.f32 %v650, %v660
      %v669 = vadd.f32 %v651, %v661
      %v670 = vadd.f32 %v652, %v662
      %v671 = vadd.f32 %v653, %v663
      %v672 = vadd.f32 %v654, %v660
      %v673 = vadd.f32 %v655, %v661
      %v674 = vadd.f32 %v656, %v662
      %v675 = vadd.f32 %v657, %v663
      %v676 = vmul.f32 %v668, 0.2
      %v677 = vmul.f32 %v669, 0.2
      %v678 = vmul.f32 %v670, 0.2
      %v679 = vmul.f32 %v671, 0.2
      %v680 = vmul.f32 %v672, 0.2
      %v681 = vmul.f32 %v673, 0.2
      %v682 = vmul.f32 %v674, 0.2
      %v683 = vmul.f32 %v675, 0.2
      %v684 = vmax.f32 %v668, %v676
      %v685 = vmax.f32 %v669, %v677
      %v686 = vmax.f32 %v670, %v678
      %v687 = vmax.f32 %v671, %v679
      %v688 = vmax.f32 %v672, %v680
      %v689 = vmax.f32 %v673, %v681
      %v690 = vmax.f32 %v674, %v682
      %v691 = vmax.f32 %v675, %v683
      %v692 = vpack.c.bf16 %v688, %v684
      %v693 = vpack.c.bf16 %v689, %v685
      %v694 = vpack.c.bf16 %v690, %v686
      %v695 = vpack.c.bf16 %v691, %v687
      %v696 = vld [vmem:[#allocation9] sm:$0xff]
      %v697 = vld [vmem:[#allocation9 + $0x8] sm:$0xff]
      %v698 = vld [vmem:[#allocation9 + $0x10] sm:$0xff]
      %v699 = vld [vmem:[#allocation9 + $0x18] sm:$0xff]
      %v700 = vld [vmem:[#allocation9 + $0x20] sm:$0xff]
      %v701 = vld [vmem:[#allocation9 + $0x28] sm:$0xff]
      %v702 = vld [vmem:[#allocation9 + $0x30] sm:$0xff]
      %v703 = vld [vmem:[#allocation9 + $0x38] sm:$0xff]
      %v704 = vld [vmem:[#allocation9 + $0x40] sm:$0xff]
      %v705 = vld [vmem:[#allocation9 + $0x48] sm:$0xff]
      %v706 = vld [vmem:[#allocation9 + $0x50] sm:$0xff]
      %v707 = vld [vmem:[#allocation9 + $0x58] sm:$0xff]
      %v708 = vld [vmem:[#allocation9 + $0x60] sm:$0xff]
      %v709 = vld [vmem:[#allocation9 + $0x68] sm:$0xff]
      %v710 = vld [vmem:[#allocation9 + $0x70] sm:$0xff]
      %v711 = vld [vmem:[#allocation9 + $0x78] sm:$0xff]
      %v712 = vld [vmem:[#allocation9 + $0x80] sm:$0xff]
      %v713 = vld [vmem:[#allocation9 + $0x88] sm:$0xff]
      %v714 = vld [vmem:[#allocation9 + $0x90] sm:$0xff]
      %v715 = vld [vmem:[#allocation9 + $0x98] sm:$0xff]
      %v716 = vld [vmem:[#allocation9 + $0xa0] sm:$0xff]
      %v717 = vld [vmem:[#allocation9 + $0xa8] sm:$0xff]
      %v718 = vld [vmem:[#allocation9 + $0xb0] sm:$0xff]
      %v719 = vld [vmem:[#allocation9 + $0xb8] sm:$0xff]
      %v720 = vld [vmem:[#allocation9 + $0xc0] sm:$0xff]
      %v721 = vld [vmem:[#allocation9 + $0xc8] sm:$0xff]
      %v722 = vld [vmem:[#allocation9 + $0xd0] sm:$0xff]
      %v723 = vld [vmem:[#allocation9 + $0xd8] sm:$0xff]
      %v724 = vld [vmem:[#allocation9 + $0xe0] sm:$0xff]
      %v725 = vld [vmem:[#allocation9 + $0xe8] sm:$0xff]
      %v726 = vld [vmem:[#allocation9 + $0xf0] sm:$0xff]
      %v727 = vld [vmem:[#allocation9 + $0xf8] sm:$0xff]
      %v728 = vld [vmem:[#allocation9 + $0x100] sm:$0xff]
      %v729 = vld [vmem:[#allocation9 + $0x108] sm:$0xff]
      %v730 = vld [vmem:[#allocation9 + $0x110] sm:$0xff]
      %v731 = vld [vmem:[#allocation9 + $0x118] sm:$0xff]
      %v732 = vld [vmem:[#allocation9 + $0x120] sm:$0xff]
      %v733 = vld [vmem:[#allocation9 + $0x128] sm:$0xff]
      %v734 = vld [vmem:[#allocation9 + $0x130] sm:$0xff]
      %v735 = vld [vmem:[#allocation9 + $0x138] sm:$0xff]
      %v736 = vld [vmem:[#allocation9 + $0x140] sm:$0xff]
      %v737 = vld [vmem:[#allocation9 + $0x148] sm:$0xff]
      %v738 = vld [vmem:[#allocation9 + $0x150] sm:$0xff]
      %v739 = vld [vmem:[#allocation9 + $0x158] sm:$0xff]
      %v740 = vld [vmem:[#allocation9 + $0x160] sm:$0xff]
      %v741 = vld [vmem:[#allocation9 + $0x168] sm:$0xff]
      %v742 = vld [vmem:[#allocation9 + $0x170] sm:$0xff]
      %v743 = vld [vmem:[#allocation9 + $0x178] sm:$0xff]
      %v744 = vld [vmem:[#allocation9 + $0x180] sm:$0xff]
      %v745 = vld [vmem:[#allocation9 + $0x188] sm:$0xff]
      %v746 = vld [vmem:[#allocation9 + $0x190] sm:$0xff]
      %v747 = vld [vmem:[#allocation9 + $0x198] sm:$0xff]
      %v748 = vld [vmem:[#allocation9 + $0x1a0] sm:$0xff]
      %v749 = vld [vmem:[#allocation9 + $0x1a8] sm:$0xff]
      %v750 = vld [vmem:[#allocation9 + $0x1b0] sm:$0xff]
      %v751 = vld [vmem:[#allocation9 + $0x1b8] sm:$0xff]
      %v752 = vld [vmem:[#allocation9 + $0x1c0] sm:$0xff]
      %v753 = vld [vmem:[#allocation9 + $0x1c8] sm:$0xff]
      %v754 = vld [vmem:[#allocation9 + $0x1d0] sm:$0xff]
      %v755 = vld [vmem:[#allocation9 + $0x1d8] sm:$0xff]
      %v756 = vld [vmem:[#allocation9 + $0x1e0] sm:$0xff]
      %v757 = vld [vmem:[#allocation9 + $0x1e8] sm:$0xff]
      %v758 = vld [vmem:[#allocation9 + $0x1f0] sm:$0xff]
      %v759 = vld [vmem:[#allocation9 + $0x1f8] sm:$0xff]
      %v760 = vld [vmem:[%s4] sm:$0x3]
      %v762 = vperm.slane %v760, 0
      %v763 = vperm.slane %v760, 1
      %v830 = vunpack.c.l.b16 %v696
      %v831 = vunpack.c.h.b16 %v696
      %v832 = vunpack.c.l.b16 %v697
      %v833 = vunpack.c.h.b16 %v697
      %v834 = vunpack.c.l.b16 %v698
      %v835 = vunpack.c.h.b16 %v698
      %v836 = vunpack.c.l.b16 %v699
      %v837 = vunpack.c.h.b16 %v699
      %v838 = vunpack.c.l.b16 %v700
      %v839 = vunpack.c.h.b16 %v700
      %v840 = vunpack.c.l.b16 %v701
      %v841 = vunpack.c.h.b16 %v701
      %v842 = vunpack.c.l.b16 %v702
      %v843 = vunpack.c.h.b16 %v702
      %v844 = vunpack.c.l.b16 %v703
      %v845 = vunpack.c.h.b16 %v703
      %v846 = vunpack.c.l.b16 %v704
      %v847 = vunpack.c.h.b16 %v704
      %v848 = vunpack.c.l.b16 %v705
      %v849 = vunpack.c.h.b16 %v705
      %v850 = vunpack.c.l.b16 %v706
      %v851 = vunpack.c.h.b16 %v706
      %v852 = vunpack.c.l.b16 %v707
      %v853 = vunpack.c.h.b16 %v707
      %v854 = vunpack.c.l.b16 %v708
      %v855 = vunpack.c.h.b16 %v708
      %v856 = vunpack.c.l.b16 %v709
      %v857 = vunpack.c.h.b16 %v709
      %v858 = vunpack.c.l.b16 %v710
      %v859 = vunpack.c.h.b16 %v710
      %v860 = vunpack.c.l.b16 %v711
      %v861 = vunpack.c.h.b16 %v711
      %v862 = vunpack.c.l.b16 %v712
      %v863 = vunpack.c.h.b16 %v712
      %v864 = vunpack.c.l.b16 %v713
      %v865 = vunpack.c.h.b16 %v713
      %v866 = vunpack.c.l.b16 %v714
      %v867 = vunpack.c.h.b16 %v714
      %v868 = vunpack.c.l.b16 %v715
      %v869 = vunpack.c.h.b16 %v715
      %v870 = vunpack.c.l.b16 %v716
      %v871 = vunpack.c.h.b16 %v716
      %v872 = vunpack.c.l.b16 %v717
      %v873 = vunpack.c.h.b16 %v717
      %v874 = vunpack.c.l.b16 %v718
      %v875 = vunpack.c.h.b16 %v718
      %v876 = vunpack.c.l.b16 %v719
      %v877 = vunpack.c.h.b16 %v719
      %v878 = vunpack.c.l.b16 %v720
      %v879 = vunpack.c.h.b16 %v720
      %v880 = vunpack.c.l.b16 %v721
      %v881 = vunpack.c.h.b16 %v721
      %v882 = vunpack.c.l.b16 %v722
      %v883 = vunpack.c.h.b16 %v722
      %v884 = vunpack.c.l.b16 %v723
      %v885 = vunpack.c.h.b16 %v723
      %v886 = vunpack.c.l.b16 %v724
      %v887 = vunpack.c.h.b16 %v724
      %v888 = vunpack.c.l.b16 %v725
      %v889 = vunpack.c.h.b16 %v725
      %v890 = vunpack.c.l.b16 %v726
      %v891 = vunpack.c.h.b16 %v726
      %v892 = vunpack.c.l.b16 %v727
      %v893 = vunpack.c.h.b16 %v727
      %v894 = vunpack.c.l.b16 %v728
      %v895 = vunpack.c.h.b16 %v728
      %v896 = vunpack.c.l.b16 %v729
      %v897 = vunpack.c.h.b16 %v729
      %v898 = vunpack.c.l.b16 %v730
      %v899 = vunpack.c.h.b16 %v730
      %v900 = vunpack.c.l.b16 %v731
      %v901 = vunpack.c.h.b16 %v731
      %v902 = vunpack.c.l.b16 %v732
      %v903 = vunpack.c.h.b16 %v732
      %v904 = vunpack.c.l.b16 %v733
      %v905 = vunpack.c.h.b16 %v733
      %v906 = vunpack.c.l.b16 %v734
      %v907 = vunpack.c.h.b16 %v734
      %v908 = vunpack.c.l.b16 %v735
      %v909 = vunpack.c.h.b16 %v735
      %v910 = vunpack.c.l.b16 %v736
      %v911 = vunpack.c.h.b16 %v736
      %v912 = vunpack.c.l.b16 %v737
      %v913 = vunpack.c.h.b16 %v737
      %v914 = vunpack.c.l.b16 %v738
      %v915 = vunpack.c.h.b16 %v738
      %v916 = vunpack.c.l.b16 %v739
      %v917 = vunpack.c.h.b16 %v739
      %v918 = vunpack.c.l.b16 %v740
      %v919 = vunpack.c.h.b16 %v740
      %v920 = vunpack.c.l.b16 %v741
      %v921 = vunpack.c.h.b16 %v741
      %v922 = vunpack.c.l.b16 %v742
      %v923 = vunpack.c.h.b16 %v742
      %v924 = vunpack.c.l.b16 %v743
      %v925 = vunpack.c.h.b16 %v743
      %v926 = vunpack.c.l.b16 %v744
      %v927 = vunpack.c.h.b16 %v744
      %v928 = vunpack.c.l.b16 %v745
      %v929 = vunpack.c.h.b16 %v745
      %v930 = vunpack.c.l.b16 %v746
      %v931 = vunpack.c.h.b16 %v746
      %v932 = vunpack.c.l.b16 %v747
      %v933 = vunpack.c.h.b16 %v747
      %v934 = vunpack.c.l.b16 %v748
      %v935 = vunpack.c.h.b16 %v748
      %v936 = vunpack.c.l.b16 %v749
      %v937 = vunpack.c.h.b16 %v749
      %v938 = vunpack.c.l.b16 %v750
      %v939 = vunpack.c.h.b16 %v750
      %v940 = vunpack.c.l.b16 %v751
      %v941 = vunpack.c.h.b16 %v751
      %v942 = vunpack.c.l.b16 %v752
      %v943 = vunpack.c.h.b16 %v752
      %v944 = vunpack.c.l.b16 %v753
      %v945 = vunpack.c.h.b16 %v753
      %v946 = vunpack.c.l.b16 %v754
      %v947 = vunpack.c.h.b16 %v754
      %v948 = vunpack.c.l.b16 %v755
      %v949 = vunpack.c.h.b16 %v755
      %v950 = vunpack.c.l.b16 %v756
      %v951 = vunpack.c.h.b16 %v756
      %v952 = vunpack.c.l.b16 %v757
      %v953 = vunpack.c.h.b16 %v757
      %v954 = vunpack.c.l.b16 %v758
      %v955 = vunpack.c.h.b16 %v758
      %v956 = vunpack.c.l.b16 %v759
      %v957 = vunpack.c.h.b16 %v759
      %v958 = vpack.c.b16 %v832, %v830
      %v959 = vpack.c.b16 %v833, %v831
      %v960 = vpack.c.b16 %v836, %v834
      %v961 = vpack.c.b16 %v837, %v835
      %v962 = vpack.c.b16 %v840, %v838
      %v963 = vpack.c.b16 %v841, %v839
      %v964 = vpack.c.b16 %v844, %v842
      %v965 = vpack.c.b16 %v845, %v843
      %v966 = vpack.c.b16 %v848, %v846
      %v967 = vpack.c.b16 %v849, %v847
      %v968 = vpack.c.b16 %v852, %v850
      %v969 = vpack.c.b16 %v853, %v851
      %v970 = vpack.c.b16 %v856, %v854
      %v971 = vpack.c.b16 %v857, %v855
      %v972 = vpack.c.b16 %v860, %v858
      %v973 = vpack.c.b16 %v861, %v859
      %v974 = vpack.c.b16 %v864, %v862
      %v975 = vpack.c.b16 %v865, %v863
      %v976 = vpack.c.b16 %v868, %v866
      %v977 = vpack.c.b16 %v869, %v867
      %v978 = vpack.c.b16 %v872, %v870
      %v979 = vpack.c.b16 %v873, %v871
      %v980 = vpack.c.b16 %v876, %v874
      %v981 = vpack.c.b16 %v877, %v875
      %v982 = vpack.c.b16 %v880, %v878
      %v983 = vpack.c.b16 %v881, %v879
      %v984 = vpack.c.b16 %v884, %v882
      %v985 = vpack.c.b16 %v885, %v883
      %v986 = vpack.c.b16 %v888, %v886
      %v987 = vpack.c.b16 %v889, %v887
      %v988 = vpack.c.b16 %v892, %v890
      %v989 = vpack.c.b16 %v893, %v891
      %v990 = vpack.c.b16 %v896, %v894
      %v991 = vpack.c.b16 %v897, %v895
      %v992 = vpack.c.b16 %v900, %v898
      %v993 = vpack.c.b16 %v901, %v899
      %v994 = vpack.c.b16 %v904, %v902
      %v995 = vpack.c.b16 %v905, %v903
      %v996 = vpack.c.b16 %v908, %v906
      %v997 = vpack.c.b16 %v909, %v907
      %v998 = vpack.c.b16 %v912, %v910
      %v999 = vpack.c.b16 %v913, %v911
      %v1000 = vpack.c.b16 %v916, %v914
      %v1001 = vpack.c.b16 %v917, %v915
      %v1002 = vpack.c.b16 %v920, %v918
      %v1003 = vpack.c.b16 %v921, %v919
      %v1004 = vpack.c.b16 %v924, %v922
      %v1005 = vpack.c.b16 %v925, %v923
      %v1006 = vpack.c.b16 %v928, %v926
      %v1007 = vpack.c.b16 %v929, %v927
      %v1008 = vpack.c.b16 %v932, %v930
      %v1009 = vpack.c.b16 %v933, %v931
      %v1010 = vpack.c.b16 %v936, %v934
      %v1011 = vpack.c.b16 %v937, %v935
      %v1012 = vpack.c.b16 %v940, %v938
      %v1013 = vpack.c.b16 %v941, %v939
      %v1014 = vpack.c.b16 %v944, %v942
      %v1015 = vpack.c.b16 %v945, %v943
      %v1016 = vpack.c.b16 %v948, %v946
      %v1017 = vpack.c.b16 %v949, %v947
      %v1018 = vpack.c.b16 %v952, %v950
      %v1019 = vpack.c.b16 %v953, %v951
      %v1020 = vpack.c.b16 %v956, %v954
      %v1021 = vpack.c.b16 %v957, %v955
      %1086 = vmatpush.bf16.msra.mxu0 %v972
      %1087 = vmatpush.bf16.msra.mxu0 %v970
      %1088 = vmatpush.bf16.msra.mxu0 %v968
      %1089 = vmatpush.bf16.msra.mxu0 %v966
      %1090 = vmatpush.bf16.msra.mxu0 %v964
      %1091 = vmatpush.bf16.msra.mxu0 %v962
      %1092 = vmatpush.bf16.msra.mxu0 %v960
      %1093 = vmatpush.bf16.msra.mxu0 %v958
      %1094 = vmatmul.bf16.gmra.mxu0 %v692
      %v1095 = vpop.f32.mrf.mxu0
      %v1096 = vadd.f32 %v762, %v1095
      %v1097 = vpop.f32.mrf.mxu0
      %v1098 = vadd.f32 %v762, %v1097
      %1099 = vdwg.mxu0
      %1100 = vmatpush.bf16.msra.mxu0 %v988
      %1101 = vmatpush.bf16.msra.mxu0 %v986
      %1102 = vmatpush.bf16.msra.mxu0 %v984
      %1103 = vmatpush.bf16.msra.mxu0 %v982
      %1104 = vmatpush.bf16.msra.mxu0 %v980
      %1105 = vmatpush.bf16.msra.mxu0 %v978
      %1106 = vmatpush.bf16.msra.mxu0 %v976
      %1107 = vmatpush.bf16.msra.mxu0 %v974
      %1108 = vmatmul.bf16.gmra.mxu0 %v693
      %v1109 = vpop.f32.mrf.mxu0
      %v1110 = vadd.f32 %v1096, %v1109
      %v1111 = vpop.f32.mrf.mxu0
      %v1112 = vadd.f32 %v1098, %v1111
      %1113 = vdwg.mxu0
      %1114 = vmatpush.bf16.msra.mxu0 %v1004
      %1115 = vmatpush.bf16.msra.mxu0 %v1002
      %1116 = vmatpush.bf16.msra.mxu0 %v1000
      %1117 = vmatpush.bf16.msra.mxu0 %v998
      %1118 = vmatpush.bf16.msra.mxu0 %v996
      %1119 = vmatpush.bf16.msra.mxu0 %v994
      %1120 = vmatpush.bf16.msra.mxu0 %v992
      %1121 = vmatpush.bf16.msra.mxu0 %v990
      %1122 = vmatmul.bf16.gmra.mxu0 %v694
      %v1123 = vpop.f32.mrf.mxu0
      %v1124 = vadd.f32 %v1110, %v1123
      %v1125 = vpop.f32.mrf.mxu0
      %v1126 = vadd.f32 %v1112, %v1125
      %1127 = vdwg.mxu0
      %1128 = vmatpush.bf16.msra.mxu0 %v1020
      %1129 = vmatpush.bf16.msra.mxu0 %v1018
      %1130 = vmatpush.bf16.msra.mxu0 %v1016
      %1131 = vmatpush.bf16.msra.mxu0 %v1014
      %1132 = vmatpush.bf16.msra.mxu0 %v1012
      %1133 = vmatpush.bf16.msra.mxu0 %v1010
      %1134 = vmatpush.bf16.msra.mxu0 %v1008
      %1135 = vmatpush.bf16.msra.mxu0 %v1006
      %1136 = vmatmul.bf16.gmra.mxu0 %v695
      %v1137 = vpop.f32.mrf.mxu0
      %v1138 = vadd.f32 %v1124, %v1137
      %v1139 = vpop.f32.mrf.mxu0
      %v1140 = vadd.f32 %v1126, %v1139
      %1141 = vdwg.mxu0
      %1142 = vmatpush.bf16.msra.mxu0 %v973
      %1143 = vmatpush.bf16.msra.mxu0 %v971
      %1144 = vmatpush.bf16.msra.mxu0 %v969
      %1145 = vmatpush.bf16.msra.mxu0 %v967
      %1146 = vmatpush.bf16.msra.mxu0 %v965
      %1147 = vmatpush.bf16.msra.mxu0 %v963
      %1148 = vmatpush.bf16.msra.mxu0 %v961
      %1149 = vmatpush.bf16.msra.mxu0 %v959
      %1150 = vmatmul.bf16.gmra.mxu0 %v692
      %v1151 = vpop.f32.mrf.mxu0
      %v1152 = vadd.f32 %v763, %v1151
      %v1153 = vpop.f32.mrf.mxu0
      %v1154 = vadd.f32 %v763, %v1153
      %1155 = vdwg.mxu0
      %1156 = vmatpush.bf16.msra.mxu0 %v989
      %1157 = vmatpush.bf16.msra.mxu0 %v987
      %1158 = vmatpush.bf16.msra.mxu0 %v985
      %1159 = vmatpush.bf16.msra.mxu0 %v983
      %1160 = vmatpush.bf16.msra.mxu0 %v981
      %1161 = vmatpush.bf16.msra.mxu0 %v979
      %1162 = vmatpush.bf16.msra.mxu0 %v977
      %1163 = vmatpush.bf16.msra.mxu0 %v975
      %1164 = vmatmul.bf16.gmra.mxu0 %v693
      %v1165 = vpop.f32.mrf.mxu0
      %v1166 = vadd.f32 %v1152, %v1165
      %v1167 = vpop.f32.mrf.mxu0
      %v1168 = vadd.f32 %v1154, %v1167
      %1169 = vdwg.mxu0
      %1170 = vmatpush.bf16.msra.mxu0 %v1005
      %1171 = vmatpush.bf16.msra.mxu0 %v1003
      %1172 = vmatpush.bf16.msra.mxu0 %v1001
      %1173 = vmatpush.bf16.msra.mxu0 %v999
      %1174 = vmatpush.bf16.msra.mxu0 %v997
      %1175 = vmatpush.bf16.msra.mxu0 %v995
      %1176 = vmatpush.bf16.msra.mxu0 %v993
      %1177 = vmatpush.bf16.msra.mxu0 %v991
      %1178 = vmatmul.bf16.gmra.mxu0 %v694
      %v1179 = vpop.f32.mrf.mxu0
      %v1180 = vadd.f32 %v1166, %v1179
      %v1181 = vpop.f32.mrf.mxu0
      %v1182 = vadd.f32 %v1168, %v1181
      %1183 = vdwg.mxu0
      %1184 = vmatpush.bf16.msra.mxu0 %v1021
      %1185 = vmatpush.bf16.msra.mxu0 %v1019
      %1186 = vmatpush.bf16.msra.mxu0 %v1017
      %1187 = vmatpush.bf16.msra.mxu0 %v1015
      %1188 = vmatpush.bf16.msra.mxu0 %v1013
      %1189 = vmatpush.bf16.msra.mxu0 %v1011
      %1190 = vmatpush.bf16.msra.mxu0 %v1009
      %1191 = vmatpush.bf16.msra.mxu0 %v1007
      %1192 = vmatmul.bf16.gmra.mxu0 %v695
      %v1193 = vpop.f32.mrf.mxu0
      %v1194 = vadd.f32 %v1180, %v1193
      %v1195 = vpop.f32.mrf.mxu0
      %v1196 = vadd.f32 %v1182, %v1195
      %1197 = vdwg.mxu0
      %v1198 = vmul.f32 %v1138, 0.2
      %v1199 = vmul.f32 %v1194, 0.2
      %v1200 = vmul.f32 %v1140, 0.2
      %v1201 = vmul.f32 %v1196, 0.2
      %v1202 = vmax.f32 %v1138, %v1198
      %v1203 = vmax.f32 %v1194, %v1199
      %v1204 = vmax.f32 %v1140, %v1200
      %v1205 = vmax.f32 %v1196, %v1201
      %v1206 = vpack.c.bf16 %v1204, %v1202
      %v1207 = vpack.c.bf16 %v1205, %v1203
      %v1208 = vld [vmem:[#allocation11] sm:$0xf]
      %v1209 = vld [vmem:[#allocation11 + $0x4] sm:$0xf]
      %v1210 = vld [vmem:[#allocation11 + $0x8] sm:$0xf]
      %v1211 = vld [vmem:[#allocation11 + $0xc] sm:$0xf]
      %v1212 = vld [vmem:[#allocation11 + $0x10] sm:$0xf]
      %v1213 = vld [vmem:[#allocation11 + $0x14] sm:$0xf]
      %v1214 = vld [vmem:[#allocation11 + $0x18] sm:$0xf]
      %v1215 = vld [vmem:[#allocation11 + $0x1c] sm:$0xf]
      %v1216 = vld [vmem:[#allocation11 + $0x20] sm:$0xf]
      %v1217 = vld [vmem:[#allocation11 + $0x24] sm:$0xf]
      %v1218 = vld [vmem:[#allocation11 + $0x28] sm:$0xf]
      %v1219 = vld [vmem:[#allocation11 + $0x2c] sm:$0xf]
      %v1220 = vld [vmem:[#allocation11 + $0x30] sm:$0xf]
      %v1221 = vld [vmem:[#allocation11 + $0x34] sm:$0xf]
      %v1222 = vld [vmem:[#allocation11 + $0x38] sm:$0xf]
      %v1223 = vld [vmem:[#allocation11 + $0x3c] sm:$0xf]
      %v1224 = vld [vmem:[#allocation11 + $0x40] sm:$0xf]
      %v1225 = vld [vmem:[#allocation11 + $0x44] sm:$0xf]
      %v1226 = vld [vmem:[#allocation11 + $0x48] sm:$0xf]
      %v1227 = vld [vmem:[#allocation11 + $0x4c] sm:$0xf]
      %v1228 = vld [vmem:[#allocation11 + $0x50] sm:$0xf]
      %v1229 = vld [vmem:[#allocation11 + $0x54] sm:$0xf]
      %v1230 = vld [vmem:[#allocation11 + $0x58] sm:$0xf]
      %v1231 = vld [vmem:[#allocation11 + $0x5c] sm:$0xf]
      %v1232 = vld [vmem:[#allocation11 + $0x60] sm:$0xf]
      %v1233 = vld [vmem:[#allocation11 + $0x64] sm:$0xf]
      %v1234 = vld [vmem:[#allocation11 + $0x68] sm:$0xf]
      %v1235 = vld [vmem:[#allocation11 + $0x6c] sm:$0xf]
      %v1236 = vld [vmem:[#allocation11 + $0x70] sm:$0xf]
      %v1237 = vld [vmem:[#allocation11 + $0x74] sm:$0xf]
      %v1238 = vld [vmem:[#allocation11 + $0x78] sm:$0xf]
      %v1239 = vld [vmem:[#allocation11 + $0x7c] sm:$0xf]
      %v1240 = vld [vmem:[%s6] sm:$0x1]
      %v1242 = vperm.slane %v1240, 0
      %v1276 = vunpack.c.l.b16 %v1208
      %v1277 = vunpack.c.l.b16 %v1209
      %v1278 = vunpack.c.l.b16 %v1210
      %v1279 = vunpack.c.l.b16 %v1211
      %v1280 = vunpack.c.l.b16 %v1212
      %v1281 = vunpack.c.l.b16 %v1213
      %v1282 = vunpack.c.l.b16 %v1214
      %v1283 = vunpack.c.l.b16 %v1215
      %v1284 = vunpack.c.l.b16 %v1216
      %v1285 = vunpack.c.l.b16 %v1217
      %v1286 = vunpack.c.l.b16 %v1218
      %v1287 = vunpack.c.l.b16 %v1219
      %v1288 = vunpack.c.l.b16 %v1220
      %v1289 = vunpack.c.l.b16 %v1221
      %v1290 = vunpack.c.l.b16 %v1222
      %v1291 = vunpack.c.l.b16 %v1223
      %v1292 = vunpack.c.l.b16 %v1224
      %v1293 = vunpack.c.l.b16 %v1225
      %v1294 = vunpack.c.l.b16 %v1226
      %v1295 = vunpack.c.l.b16 %v1227
      %v1296 = vunpack.c.l.b16 %v1228
      %v1297 = vunpack.c.l.b16 %v1229
      %v1298 = vunpack.c.l.b16 %v1230
      %v1299 = vunpack.c.l.b16 %v1231
      %v1300 = vunpack.c.l.b16 %v1232
      %v1301 = vunpack.c.l.b16 %v1233
      %v1302 = vunpack.c.l.b16 %v1234
      %v1303 = vunpack.c.l.b16 %v1235
      %v1304 = vunpack.c.l.b16 %v1236
      %v1305 = vunpack.c.l.b16 %v1237
      %v1306 = vunpack.c.l.b16 %v1238
      %v1307 = vunpack.c.l.b16 %v1239
      %v1308 = vpack.c.b16 %v1277, %v1276
      %v1309 = vpack.c.b16 %v1279, %v1278
      %v1310 = vpack.c.b16 %v1281, %v1280
      %v1311 = vpack.c.b16 %v1283, %v1282
      %v1312 = vpack.c.b16 %v1285, %v1284
      %v1313 = vpack.c.b16 %v1287, %v1286
      %v1314 = vpack.c.b16 %v1289, %v1288
      %v1315 = vpack.c.b16 %v1291, %v1290
      %v1316 = vpack.c.b16 %v1293, %v1292
      %v1317 = vpack.c.b16 %v1295, %v1294
      %v1318 = vpack.c.b16 %v1297, %v1296
      %v1319 = vpack.c.b16 %v1299, %v1298
      %v1320 = vpack.c.b16 %v1301, %v1300
      %v1321 = vpack.c.b16 %v1303, %v1302
      %v1322 = vpack.c.b16 %v1305, %v1304
      %v1323 = vpack.c.b16 %v1307, %v1306
      %1340 = vmatpush.bf16.msra.mxu0 %v1315
      %1341 = vmatpush.bf16.msra.mxu0 %v1314
      %1342 = vmatpush.bf16.msra.mxu0 %v1313
      %1343 = vmatpush.bf16.msra.mxu0 %v1312
      %1344 = vmatpush.bf16.msra.mxu0 %v1311
      %1345 = vmatpush.bf16.msra.mxu0 %v1310
      %1346 = vmatpush.bf16.msra.mxu0 %v1309
      %1347 = vmatpush.bf16.msra.mxu0 %v1308
      %1348 = vmatmul.bf16.gmra.mxu0 %v1206
      %v1349 = vpop.f32.mrf.mxu0
      %v1350 = vadd.f32 %v1242, %v1349
      %v1351 = vpop.f32.mrf.mxu0
      %v1352 = vadd.f32 %v1242, %v1351
      %1353 = vdwg.mxu0
      %1354 = vmatpush.bf16.msra.mxu0 %v1323
      %1355 = vmatpush.bf16.msra.mxu0 %v1322
      %1356 = vmatpush.bf16.msra.mxu0 %v1321
      %1357 = vmatpush.bf16.msra.mxu0 %v1320
      %1358 = vmatpush.bf16.msra.mxu0 %v1319
      %1359 = vmatpush.bf16.msra.mxu0 %v1318
      %1360 = vmatpush.bf16.msra.mxu0 %v1317
      %1361 = vmatpush.bf16.msra.mxu0 %v1316
      %1362 = vmatmul.bf16.gmra.mxu0 %v1207
      %v1363 = vpop.f32.mrf.mxu0
      %v1364 = vadd.f32 %v1350, %v1363
      %v1365 = vpop.f32.mrf.mxu0
      %v1366 = vadd.f32 %v1352, %v1365
      %1367 = vdwg.mxu0
      %v1368 = vxor.u32 %v1364, 2147483648
      %v1369 = vxor.u32 %v1366, 2147483648
      %v1370 = vmul.f32 %v1368, 1.442695
      %v1371 = vpow.pop %v1370
      %v1372 = vmul.f32 %v1369, 1.442695
      %v1373 = vpow.pop %v1372
      %v1374 = vadd.f32 %v1371, 1.0
      %v1375 = vadd.f32 %v1373, 1.0
      %v1376 = vrcp.pop %v1374
      %v1377 = vmul.f32 %v1374, %v1376
      %v1378 = vsub.f32 1.0, %v1377
      %v1379 = vmul.f32 %v1376, %v1378
      %v1380 = vadd.f32 %v1376, %v1379
      %vm1381 = vweird.f32 %v1374
      %vm1382 = vweird.f32 %v1376
      %vm1383 = vmor %vm1381, %vm1382
      %v1384 = vsel %vm1383, %v1376, %v1380
      %v1385 = vand.u32 2147483647, %v1374
      %vm1386 = vcmp.eq.f32.partialorder %v1385, 8.507059e+37
      %v1387 = vand.u32 %v1374, 2147483648
      %v1388 = vor.u32 1.1754944e-38, %v1387
      %v1389 = vsel %vm1386, %v1388, %v1384
      %v1390 = vmul.f32 1.0, %v1389
      %v1391 = vrcp.pop %v1375
      %v1392 = vmul.f32 %v1375, %v1391
      %v1393 = vsub.f32 1.0, %v1392
      %v1394 = vmul.f32 %v1391, %v1393
      %v1395 = vadd.f32 %v1391, %v1394
      %vm1396 = vweird.f32 %v1375
      %vm1397 = vweird.f32 %v1391
      %vm1398 = vmor %vm1396, %vm1397
      %v1399 = vsel %vm1398, %v1391, %v1395
      %v1400 = vand.u32 2147483647, %v1375
      %vm1401 = vcmp.eq.f32.partialorder %v1400, 8.507059e+37
      %v1402 = vand.u32 %v1375, 2147483648
      %v1403 = vor.u32 1.1754944e-38, %v1402
      %v1404 = vsel %vm1401, %v1403, %v1399
      %v1405 = vmul.f32 1.0, %v1404
      %v1406 = vpack.c.bf16 %v1390, %v1390
      %v1407 = vpack.c.bf16 %v1405, %v1405
      %1408 = vst [vmem:[#allocation12] sm:$0xf] %v1406
      %1409 = vst [vmem:[#allocation12 + $0x4] sm:$0xf] %v1407
    $region57: #{tpu_custom_call.1} parent=1 // pred_fallthru
      _
    // Predicated region
    $region58: #{tpu_custom_call.1} parent=1 // pred_check
      _
    $region59: #{tpu_custom_call.1} parent=1 // pred_check_branch
      %1411 = sbr.rel (0) target = $region61
    $region60: #{tpu_custom_call.1} parent=1 // pred_region
      %1413 = vsyncadd [#allocation5], 0
      %s1414 = sshll.u32 [#allocation12], 4
      %s1415 = int_to_ptr.vmem [resolvable:$true] %s1414
      %s1416 = sshll.u32 %s7, 4
      %s1417 = int_to_ptr.hbm [resolvable:$true] %s1416
      %1422 = dma.vmem_to_hbm [thread:$0]  %s1415, 128, %s1417, [#allocation5], 64, 64, 4
    $region61: #{tpu_custom_call.1} parent=1 // pred_fallthru
      _
    // Predicated region
    $region62: #{tpu_custom_call.1} parent=1 // pred_check
      _
    $region63: #{tpu_custom_call.1} parent=1 // pred_check_branch
      %1424 = sbr.rel (0) target = $region65
    $region64: #{tpu_custom_call.1} parent=1 // pred_region
      %1426 = dma.done [#allocation5], 128
    $region65: #{tpu_custom_call.1} parent=1 // pred_fallthru
      _
    %1427 = vsyncpa [#allocation4], 1
    %1428 = vsyncpa [#allocation7], 1
    %1429 = vsyncpa [#allocation10], 1
    %1430 = vsyncpa [#allocation5], 1

</llo_original>
